<compile_context>
chip_gen: v7x
topology: tpu7x:2x2x1
jax: 0.10.0
libtpu: 0.0.40
codegen_flags: <defaults>
</compile_context>

<pallas_src>
import functools

import jax
import jax.numpy as jnp
import numpy as np
from jax.experimental import pallas as pl
from jax.experimental.pallas import tpu as pltpu


def _placement_matrices(r, hh, hw, hh_pad, hw_pad, ch_tile, blockdiag, dtype):
    """Host-side one-hot matrices for the PADDED scratch layout.

    R[a*r + i, i*hh_pad + a] = 1        (row interleave,  shape (H, r*hh_pad))
    E[j*hw_pad + q, q*r + j] = 1        (col interleave,  shape (r*hw_pad, W))
    Padded rows/columns stay all-zero, so they never contribute.
    If `blockdiag`, R is replicated block-diagonally ch_tile times so the row
    interleave of the whole channel tile is a single matmul.
    """
    H, W = hh * r, hw * r
    R = np.zeros((H, r * hh_pad), np.float32)
    for i in range(r):
        for a in range(hh):
            R[a * r + i, i * hh_pad + a] = 1.0
    E = np.zeros((r * hw_pad, W), np.float32)
    for j in range(r):
        for q in range(hw):
            E[j * hw_pad + q, q * r + j] = 1.0
    if blockdiag:
        Rb = np.zeros((ch_tile * H, ch_tile * r * hh_pad), np.float32)
        for c in range(ch_tile):
            Rb[c * H:(c + 1) * H, c * r * hh_pad:(c + 1) * r * hh_pad] = R
        R = Rb
    return jnp.asarray(R, dtype), jnp.asarray(E, dtype)


def _pixel_shuffle_kernel(r_ref, e_ref, x_ref, o_ref, xb_ref, *,
                          r, hh, hw, hh_pad, hw_pad, ch_tile,
                          blockdiag, zero_pad):
    """Produce `ch_tile` full output channels per grid step.

    r_ref : (H, r*hh_pad) or block-diag (ch_tile*H, ch_tile*r*hh_pad)  resident
    e_ref : (r*hw_pad, W)                                               resident
    x_ref : (ch_tile*r*r, hh, hw)   input planes of these output channels
    o_ref : (ch_tile, H, W)         lane-dense output block (last dim = W)
    xb_ref: (ch_tile*r*hh_pad, r*hw_pad) VMEM scratch, vreg-aligned slots
    """
    H = hh * r
    cdt = xb_ref.dtype

    if zero_pad:
        # Padded slots feed the 0/1 matmuls; clear stale VMEM (NaN * 0 = NaN).
        # Done every step so it is also correct under megacore grid splitting.
        xb_ref[...] = jnp.zeros_like(xb_ref)

    # Block-place all planes at (sublane, 128)-aligned offsets: masked stores,
    # no cross-lane relayout, no accumulation.
    for c in range(ch_tile):
        for i in range(r):
            for j in range(r):
                row0 = (c * r + i) * hh_pad
                col0 = j * hw_pad
                xb_ref[row0:row0 + hh, col0:col0 + hw] = (
                    x_ref[c * r * r + i * r + j].astype(cdt))

    # Column interleave for the WHOLE channel tile in one MXU issue
    # (exact: E is 0/1, f32 accumulation).
    slab = jnp.dot(xb_ref[...], e_ref[...],
                   preferred_element_type=jnp.float32).astype(cdt)

    if blockdiag:
        # Row interleave of the whole tile in a single block-diagonal matmul;
        # one cast, then per-channel slab stores.
        out = jnp.dot(r_ref[...], slab,
                      preferred_element_type=jnp.float32).astype(o_ref.dtype)
        for c in range(ch_tile):
            o_ref[c] = out[c * H:(c + 1) * H, :]
    else:
        Rm = r_ref[...]                       # hoisted once per grid step
        for c in range(ch_tile):
            o_ref[c] = jnp.dot(
                Rm, slab[c * r * hh_pad:(c + 1) * r * hh_pad, :],
                preferred_element_type=jnp.float32).astype(o_ref.dtype)


def pixel_shuffle(x, upscale_factor, *, max_ch_tile=16,
                  block_budget_bytes=2 << 20, vmem_budget_bytes=20 << 20):
    """Pallas TPU implementation of torch.nn.PixelShuffle semantics (NCHW)."""
    r = int(upscale_factor)
    B, C, hh, hw = x.shape
    assert C % (r * r) == 0, "channels must be divisible by upscale_factor**2"
    OC = C // (r * r)
    H, W = hh * r, hw * r

    # Compute dtype: bf16 stays bf16 on the MXU; everything else goes via f32.
    cdt = jnp.bfloat16 if x.dtype == jnp.dtype(jnp.bfloat16) else jnp.float32
    cdt_size = jnp.dtype(cdt).itemsize
    sublane = 16 if cdt == jnp.bfloat16 else 8
    hh_pad = -(-hh // sublane) * sublane          # round up to sublane multiple
    hw_pad = -(-hw // 128) * 128                  # round up to 128 lanes
    zero_pad = (hh_pad != hh) or (hw_pad != hw)

    # ---- Tile selection over the folded (batch x out-channel) axis ----------
    G = B * OC
    per_ch_in = r * r * hh * hw * x.dtype.itemsize
    per_ch_out = H * W * x.dtype.itemsize
    per_ch_scr = (r * hh_pad) * (r * hw_pad) * cdt_size
    per_ch_vmem = 2 * per_ch_in + 2 * per_ch_out + per_ch_scr   # dbl-buffered

    ch_cap = min(max_ch_tile,
                 max(1, block_budget_bytes // max(per_ch_in, 1)),
                 max(1, vmem_budget_bytes // max(per_ch_vmem, 1)),
                 max(1, 64 // (r * r)))           # bound the static unroll
    ch_tile = int(max(1, min(ch_cap, G)))
    if G >= 2:                                    # v7x megacore: >= 2 steps
        ch_tile = min(ch_tile, -(-G // 2))

    # Prefer an exact divisor of G near the target; otherwise pad the folded
    # axis so every grid step is full (never collapse the tile to 1).
    pad_g = 0
    lo = max(1, (2 * ch_tile + 2) // 3)
    for d in range(ch_tile, lo - 1, -1):
        if G % d == 0:
            ch_tile = d
            break
    else:
        pad_g = (-G) % ch_tile
    G_pad = G + pad_g
    n_tiles = G_pad // ch_tile

    blockdiag = (ch_tile * H) <= 512
    Rm, Em = _placement_matrices(r, hh, hw, hh_pad, hw_pad,
                                 ch_tile, blockdiag, cdt)

    # Free leading-dim merge: (B, C, hh, hw) -> (B*OC*r*r, hh, hw); folded
    # channel gc = b*OC + oc owns planes [gc*r*r, (gc+1)*r*r).
    xf = x.reshape(B * C, hh, hw)
    if pad_g:
        xf = jnp.pad(xf, ((0, pad_g * r * r), (0, 0), (0, 0)))

    kernel = functools.partial(_pixel_shuffle_kernel,
                               r=r, hh=hh, hw=hw, hh_pad=hh_pad, hw_pad=hw_pad,
                               ch_tile=ch_tile, blockdiag=blockdiag,
                               zero_pad=zero_pad)

    # Advisory cost: memory-bound op with a handful of one-hot MACs.
    m1, k1 = ch_tile * r * hh_pad, r * hw_pad
    flops_step = 2 * m1 * k1 * W
    if blockdiag:
        flops_step += 2 * (ch_tile * H) * (ch_tile * r * hh_pad) * W
    else:
        flops_step += ch_tile * 2 * H * (r * hh_pad) * W
    bytes_accessed = int(xf.size * xf.dtype.itemsize
                         + G_pad * H * W * x.dtype.itemsize
                         + (Rm.size + Em.size) * cdt_size)
    cost = pl.CostEstimate(flops=int(n_tiles * flops_step), transcendentals=0,
                           bytes_accessed=bytes_accessed)

    # Explicit VMEM budget (covers R/E + double-buffered blocks + scratch);
    # <= 48 MiB keeps headroom on v7x (64 MiB) and raises v5e's 16 MiB default.
    vmem_est = 2 * (Rm.size + Em.size) * cdt_size + ch_tile * per_ch_vmem
    vmem_limit = int(min(max(2 * vmem_est + (4 << 20), 32 << 20), 48 << 20))

    out = pl.pallas_call(
        kernel,
        out_shape=jax.ShapeDtypeStruct((G_pad, H, W), x.dtype),
        grid=(n_tiles,),
        in_specs=[
            # One-hot matrices: constant block index -> DMA'd once, resident.
            pl.BlockSpec(Rm.shape, lambda g: (0, 0)),
            pl.BlockSpec(Em.shape, lambda g: (0, 0)),
            # ch_tile*r*r contiguous input planes of this channel tile.
            pl.BlockSpec((ch_tile * r * r, hh, hw), lambda g: (g, 0, 0)),
        ],
        # Lane-dense output block: last dim is the full output width W.
        out_specs=pl.BlockSpec((ch_tile, H, W), lambda g: (g, 0, 0)),
        scratch_shapes=[pltpu.VMEM((ch_tile * r * hh_pad, r * hw_pad), cdt)],
        compiler_params=pltpu.CompilerParams(
            dimension_semantics=("parallel",),
            vmem_limit_bytes=vmem_limit),
        cost_estimate=cost,
    )(Rm, Em, xf)

    if pad_g:
        out = out[:G]
    return out.reshape(B, OC, H, W)


def _reference_pixel_shuffle(x, r):
    """Pure-JAX reference mirroring the PyTorch forward exactly."""
    B, C, hh, hw = x.shape
    OC = C // (r * r)
    xv = x.reshape(B, OC, r, r, hh, hw)
    return jnp.transpose(xv, (0, 1, 4, 2, 5, 3)).reshape(B, OC, hh * r, hw * r)


if __name__ == "__main__":
    # MyPixelShuffle has no learned parameters; only the upscale_factor.
    upscale_factor = 2
    B, C, hh, hw = 2, 8, 16, 16   # -> out_channels = 2, output spatial 32x32

    key = jax.random.PRNGKey(0)
    x = jax.random.normal(key, (B, C, hh, hw), dtype=jnp.float32)

    out = jax.block_until_ready(pixel_shuffle(x, upscale_factor))
    ref = _reference_pixel_shuffle(x, upscale_factor)
    assert out.shape == (B, C // upscale_factor ** 2,
                         hh * upscale_factor, hw * upscale_factor)
    np.testing.assert_allclose(np.asarray(out), np.asarray(ref),
                               rtol=1e-6, atol=1e-6)

    # bf16 path: planes + placement matrices stay bf16 on the MXU (still exact).
    xb = x.astype(jnp.bfloat16)
    outb = jax.block_until_ready(pixel_shuffle(xb, upscale_factor))
    refb = _reference_pixel_shuffle(xb, upscale_factor)
    np.testing.assert_allclose(np.asarray(outb.astype(jnp.float32)),
                               np.asarray(refb.astype(jnp.float32)),
                               rtol=1e-2, atol=1e-2)

    print("KERNEL_OK")
</pallas_src>

<mosaic_0001>
module attributes {stable_mosaic.version = 11 : i64} {
  func.func @_pixel_shuffle_kernel(%arg0: i32, %arg1: memref<64x64xf32, #tpu.memory_space<vmem>>, %arg2: memref<256x32xf32, #tpu.memory_space<vmem>>, %arg3: memref<8x16x16xf32, #tpu.memory_space<vmem>>, %arg4: memref<2x32x32xf32, #tpu.memory_space<vmem>>, %arg5: memref<64x256xf32, #tpu.memory_space<vmem>>) attributes {dimension_semantics = [#tpu.dimension_semantics<parallel>], iteration_bounds = array<i64: 2>, scalar_prefetch = 0 : i64, scratch_operands = 1 : i64, tpu.core_type = #tpu.core_type<tc>, window_params = [{pipeline_mode = #tpu.pipeline_mode<synchronous>, transform_indices = @transform_0, window_bounds = array<i64: 64, 64>}, {pipeline_mode = #tpu.pipeline_mode<synchronous>, transform_indices = @transform_1, window_bounds = array<i64: 256, 32>}, {transform_indices = @transform_2, window_bounds = array<i64: 8, 16, 16>}, {transform_indices = @transform_3, window_bounds = array<i64: 2, 32, 32>}]} {
    %cst = arith.constant 0.000000e+00 : f32
    %0 = vector.broadcast %cst : f32 to vector<64x256xf32>
    %c0 = arith.constant 0 : index
    %c0_0 = arith.constant 0 : index
    %1 = vector.load %arg5[%c0, %c0_0] : memref<64x256xf32, #tpu.memory_space<vmem>>, vector<64x256xf32>
    tpu.vector_store %arg5[%c0, %c0_0], %0 {strides = array<i32>} : memref<64x256xf32, #tpu.memory_space<vmem>>, vector<64x256xf32>,
    %c0_1 = arith.constant 0 : index
    %c0_2 = arith.constant 0 : index
    %c0_3 = arith.constant 0 : index
    %2 = vector.load %arg3[%c0_1, %c0_2, %c0_3] : memref<8x16x16xf32, #tpu.memory_space<vmem>>, vector<1x16x16xf32>
    %3 = vector.shape_cast %2 : vector<1x16x16xf32> to vector<16x16xf32>
    %c0_4 = arith.constant 0 : index
    %c0_5 = arith.constant 0 : index
    %4 = vector.load %arg5[%c0_4, %c0_5] : memref<64x256xf32, #tpu.memory_space<vmem>>, vector<16x16xf32>
    tpu.vector_store %arg5[%c0_4, %c0_5], %3 {strides = array<i32>} : memref<64x256xf32, #tpu.memory_space<vmem>>, vector<16x16xf32>,
    %c1 = arith.constant 1 : index
    %c0_6 = arith.constant 0 : index
    %c0_7 = arith.constant 0 : index
    %5 = vector.load %arg3[%c1, %c0_6, %c0_7] : memref<8x16x16xf32, #tpu.memory_space<vmem>>, vector<1x16x16xf32>
    %6 = vector.shape_cast %5 : vector<1x16x16xf32> to vector<16x16xf32>
    %c0_8 = arith.constant 0 : index
    %c128 = arith.constant 128 : index
    %7 = vector.load %arg5[%c0_8, %c128] : memref<64x256xf32, #tpu.memory_space<vmem>>, vector<16x16xf32>
    tpu.vector_store %arg5[%c0_8, %c128], %6 {strides = array<i32>} : memref<64x256xf32, #tpu.memory_space<vmem>>, vector<16x16xf32>,
    %c2 = arith.constant 2 : index
    %c0_9 = arith.constant 0 : index
    %c0_10 = arith.constant 0 : index
    %8 = vector.load %arg3[%c2, %c0_9, %c0_10] : memref<8x16x16xf32, #tpu.memory_space<vmem>>, vector<1x16x16xf32>
    %9 = vector.shape_cast %8 : vector<1x16x16xf32> to vector<16x16xf32>
    %c16 = arith.constant 16 : index
    %c0_11 = arith.constant 0 : index
    %10 = vector.load %arg5[%c16, %c0_11] : memref<64x256xf32, #tpu.memory_space<vmem>>, vector<16x16xf32>
    tpu.vector_store %arg5[%c16, %c0_11], %9 {strides = array<i32>} : memref<64x256xf32, #tpu.memory_space<vmem>>, vector<16x16xf32>,
    %c3 = arith.constant 3 : index
    %c0_12 = arith.constant 0 : index
    %c0_13 = arith.constant 0 : index
    %11 = vector.load %arg3[%c3, %c0_12, %c0_13] : memref<8x16x16xf32, #tpu.memory_space<vmem>>, vector<1x16x16xf32>
    %12 = vector.shape_cast %11 : vector<1x16x16xf32> to vector<16x16xf32>
    %c16_14 = arith.constant 16 : index
    %c128_15 = arith.constant 128 : index
    %13 = vector.load %arg5[%c16_14, %c128_15] : memref<64x256xf32, #tpu.memory_space<vmem>>, vector<16x16xf32>
    tpu.vector_store %arg5[%c16_14, %c128_15], %12 {strides = array<i32>} : memref<64x256xf32, #tpu.memory_space<vmem>>, vector<16x16xf32>,
    %c4 = arith.constant 4 : index
    %c0_16 = arith.constant 0 : index
    %c0_17 = arith.constant 0 : index
    %14 = vector.load %arg3[%c4, %c0_16, %c0_17] : memref<8x16x16xf32, #tpu.memory_space<vmem>>, vector<1x16x16xf32>
    %15 = vector.shape_cast %14 : vector<1x16x16xf32> to vector<16x16xf32>
    %c32 = arith.constant 32 : index
    %c0_18 = arith.constant 0 : index
    %16 = vector.load %arg5[%c32, %c0_18] : memref<64x256xf32, #tpu.memory_space<vmem>>, vector<16x16xf32>
    tpu.vector_store %arg5[%c32, %c0_18], %15 {strides = array<i32>} : memref<64x256xf32, #tpu.memory_space<vmem>>, vector<16x16xf32>,
    %c5 = arith.constant 5 : index
    %c0_19 = arith.constant 0 : index
    %c0_20 = arith.constant 0 : index
    %17 = vector.load %arg3[%c5, %c0_19, %c0_20] : memref<8x16x16xf32, #tpu.memory_space<vmem>>, vector<1x16x16xf32>
    %18 = vector.shape_cast %17 : vector<1x16x16xf32> to vector<16x16xf32>
    %c32_21 = arith.constant 32 : index
    %c128_22 = arith.constant 128 : index
    %19 = vector.load %arg5[%c32_21, %c128_22] : memref<64x256xf32, #tpu.memory_space<vmem>>, vector<16x16xf32>
    tpu.vector_store %arg5[%c32_21, %c128_22], %18 {strides = array<i32>} : memref<64x256xf32, #tpu.memory_space<vmem>>, vector<16x16xf32>,
    %c6 = arith.constant 6 : index
    %c0_23 = arith.constant 0 : index
    %c0_24 = arith.constant 0 : index
    %20 = vector.load %arg3[%c6, %c0_23, %c0_24] : memref<8x16x16xf32, #tpu.memory_space<vmem>>, vector<1x16x16xf32>
    %21 = vector.shape_cast %20 : vector<1x16x16xf32> to vector<16x16xf32>
    %c48 = arith.constant 48 : index
    %c0_25 = arith.constant 0 : index
    %22 = vector.load %arg5[%c48, %c0_25] : memref<64x256xf32, #tpu.memory_space<vmem>>, vector<16x16xf32>
    tpu.vector_store %arg5[%c48, %c0_25], %21 {strides = array<i32>} : memref<64x256xf32, #tpu.memory_space<vmem>>, vector<16x16xf32>,
    %c7 = arith.constant 7 : index
    %c0_26 = arith.constant 0 : index
    %c0_27 = arith.constant 0 : index
    %23 = vector.load %arg3[%c7, %c0_26, %c0_27] : memref<8x16x16xf32, #tpu.memory_space<vmem>>, vector<1x16x16xf32>
    %24 = vector.shape_cast %23 : vector<1x16x16xf32> to vector<16x16xf32>
    %c48_28 = arith.constant 48 : index
    %c128_29 = arith.constant 128 : index
    %25 = vector.load %arg5[%c48_28, %c128_29] : memref<64x256xf32, #tpu.memory_space<vmem>>, vector<16x16xf32>
    tpu.vector_store %arg5[%c48_28, %c128_29], %24 {strides = array<i32>} : memref<64x256xf32, #tpu.memory_space<vmem>>, vector<16x16xf32>,
    %c0_30 = arith.constant 0 : index
    %c0_31 = arith.constant 0 : index
    %26 = vector.load %arg5[%c0_30, %c0_31] : memref<64x256xf32, #tpu.memory_space<vmem>>, vector<64x256xf32>
    %c0_32 = arith.constant 0 : index
    %c0_33 = arith.constant 0 : index
    %27 = vector.load %arg2[%c0_32, %c0_33] : memref<256x32xf32, #tpu.memory_space<vmem>>, vector<256x32xf32>
    %cst_34 = arith.constant dense<0.000000e+00> : vector<64x32xf32>
    %28 = tpu.matmul %26, %27, %cst_34 {dimension_numbers = #tpu.dot_dimension_numbers<[1], [0], [0], [1], [0, 0, 1, 1], [], []>} : vector<64x256xf32>, vector<256x32xf32>, vector<64x32xf32> -> vector<64x32xf32>
    %c0_35 = arith.constant 0 : index
    %c0_36 = arith.constant 0 : index
    %29 = vector.load %arg1[%c0_35, %c0_36] : memref<64x64xf32, #tpu.memory_space<vmem>>, vector<64x64xf32>
    %cst_37 = arith.constant dense<0.000000e+00> : vector<64x32xf32>
    %30 = tpu.matmul %29, %28, %cst_37 {dimension_numbers = #tpu.dot_dimension_numbers<[1], [0], [0], [1], [0, 0, 1, 1], [], []>} : vector<64x64xf32>, vector<64x32xf32>, vector<64x32xf32> -> vector<64x32xf32>
    %31 = vector.extract_strided_slice %30 {offsets = [0, 0], sizes = [32, 32], strides = [1, 1]} : vector<64x32xf32> to vector<32x32xf32>
    %c0_38 = arith.constant 0 : index
    %c0_39 = arith.constant 0 : index
    %c0_40 = arith.constant 0 : index
    %32 = vector.load %arg4[%c0_38, %c0_39, %c0_40] : memref<2x32x32xf32, #tpu.memory_space<vmem>>, vector<1x32x32xf32>
    %33 = vector.shape_cast %32 : vector<1x32x32xf32> to vector<32x32xf32>
    %34 = vector.shape_cast %31 : vector<32x32xf32> to vector<1x32x32xf32>
    tpu.vector_store %arg4[%c0_38, %c0_39, %c0_40], %34 {strides = array<i32>} : memref<2x32x32xf32, #tpu.memory_space<vmem>>, vector<1x32x32xf32>,
    %35 = vector.extract_strided_slice %30 {offsets = [32, 0], sizes = [32, 32], strides = [1, 1]} : vector<64x32xf32> to vector<32x32xf32>
    %c1_41 = arith.constant 1 : index
    %c0_42 = arith.constant 0 : index
    %c0_43 = arith.constant 0 : index
    %36 = vector.load %arg4[%c1_41, %c0_42, %c0_43] : memref<2x32x32xf32, #tpu.memory_space<vmem>>, vector<1x32x32xf32>
    %37 = vector.shape_cast %36 : vector<1x32x32xf32> to vector<32x32xf32>
    %38 = vector.shape_cast %35 : vector<32x32xf32> to vector<1x32x32xf32>
    tpu.vector_store %arg4[%c1_41, %c0_42, %c0_43], %38 {strides = array<i32>} : memref<2x32x32xf32, #tpu.memory_space<vmem>>, vector<1x32x32xf32>,
    return
  }
  func.func @transform_0(%arg0: i32) -> (i32, i32) {
    %c0_i32 = arith.constant 0 : i32
    %c0_i32_0 = arith.constant 0 : i32
    %c0_i32_1 = arith.constant 0 : i32
    return %c0_i32, %c0_i32_0 : i32, i32
  }
  func.func @transform_1(%arg0: i32) -> (i32, i32) {
    %c0_i32 = arith.constant 0 : i32
    %c0_i32_0 = arith.constant 0 : i32
    %c0_i32_1 = arith.constant 0 : i32
    return %c0_i32, %c0_i32_0 : i32, i32
  }
  func.func @transform_2(%arg0: i32) -> (i32, i32, i32) {
    %c0_i32 = arith.constant 0 : i32
    %c0_i32_0 = arith.constant 0 : i32
    %c0_i32_1 = arith.constant 0 : i32
    return %arg0, %c0_i32, %c0_i32_0 : i32, i32, i32
  }
  func.func @transform_3(%arg0: i32) -> (i32, i32, i32) {
    %c0_i32 = arith.constant 0 : i32
    %c0_i32_0 = arith.constant 0 : i32
    %c0_i32_1 = arith.constant 0 : i32
    return %arg0, %c0_i32, %c0_i32_0 : i32, i32, i32
  }
}

</mosaic_0001>

<llo_original>
// kernel: tpu_custom_call.1
$region0: #{tpu_custom_call.1}
  #allocation0 [shape = 'u32[]', space=smem, size = 0x4, offset = 0x4, fixed_abs, tag = 'smem constant byte address 0x4 - core index']
  #allocation1 [shape = 'u32[144,128]{1,0:T(1,128)}', space=vmem, size = 0x12000, scoped, tag = 'internal scratch']
  #allocation2 [shape = 'f32[64,256]{1,0:T(8,128)}', space=vmem, size = 0x10000, scoped, tag = 'scratch operand']
  %s0 = inlined_call_operand.vmem [shape: f32[64,64], index: 0, kind: input, shape index: {}]
  %s1 = inlined_call_operand.vmem [shape: f32[256,32], index: 1, kind: input, shape index: {}]
  %s2 = inlined_call_operand.vmem [shape: f32[16,16,16], index: 2, kind: input, shape index: {}]
  %s3 = inlined_call_operand.hbm [shape: f32[4,32,32], index: 3, kind: output, shape index: {}]
  %s4 = sld [smem:[#allocation0]]
  $region45: #{tpu_custom_call.1} parent=0
    _
  %s6 = ssub.s32 1, %s4
  %s7 = scalar_select 0, %s6, %s4
  $region1: #{tpu_custom_call.1} parent=0
    #allocation3 [shape = 'u8[65536]{0}', space=vmem, size = 0x10000, scoped, tag = 'output window, operand 0']
    #allocation4 [shape = 's32[2]{0}', space=sflag, size = 0x8, scoped, tag = 'scoped memory for tpu_custom_call.1']
    %8 = vsyncpa [#allocation4], 0
    %s9 = scalar_lea.sflag [#allocation4], 1
    %10 = vsyncpa %s9, 0
    loop: start=0, step=1, limit=4
    $region2: #{tpu_custom_call.1} parent=1 // loop_pre_header
      _
    $region3: #{tpu_custom_call.1} parent=1 // loop_header
      %s12 = sphi 0, %s16
      %p13 = scmp.ge.s32.totalorder %s12, 4
      %s20 = sphi 0, %s20
      %s22 = sphi 0, %s20
      %s23 = sphi 0, %s22
      %s37 = sphi 0, %s23
      %s41 = sphi 0, %s41
      %s43 = sphi 0, %s41
      %s44 = sphi 0, %s43
      %s58 = sphi 0, %s44
      %s64 = sphi 0, %s66
      %s67 = sphi 0, %s64
      %s68 = sphi 0, %s67
      %s84 = sphi 0, %s68
      %s90 = sphi 0, %s92
      %s93 = sphi 0, %s90
      %s94 = sphi 0, %s93
      %s110 = sphi 0, %s94
    $region4: #{tpu_custom_call.1} parent=1 // loop_header_branch
      %15 = sbr.rel (%p13) target = $region8
    $region5: #{tpu_custom_call.1} parent=1 // loop_body
      %s17 = ssub.s32 %s12, 1
      %s18 = ssub.s32 %s12, 2
      %s19 = sadd.s32 %s12, 1
      %s21 = sadd.s32 %s20, 1
      %p24 = scmp.eq.s32.totalorder %s12, 1
      %p25 = scmp.ne.s32.totalorder %s20, %s22
      %p26 = scmp.eq.s32.totalorder %s12, 0
      %p27 = por %p25, %p26
      %p28 = scmp.ne.s32.totalorder %s20, %s22
      %p29 = scmp.eq.s32.totalorder %s17, 1
      %p30 = por %p28, %p29
      %p31 = scmp.ne.s32.totalorder %s22, %s23
      %p32 = scmp.eq.s32.totalorder %s17, 0
      %p33 = por %p31, %p32
      %p34 = scmp.ne.s32.totalorder %s22, %s23
      %p35 = scmp.eq.s32.totalorder %s18, 1
      %p36 = por %p34, %p35
      %p38 = scmp.ne.s32.totalorder %s23, %s37
      %p39 = scmp.eq.s32.totalorder %s18, 0
      %p40 = por %p38, %p39
      %s42 = sadd.s32 %s41, 1
      %p45 = scmp.eq.s32.totalorder %s12, 1
      %p46 = scmp.ne.s32.totalorder %s41, %s43
      %p47 = scmp.eq.s32.totalorder %s12, 0
      %p48 = por %p46, %p47
      %p49 = scmp.ne.s32.totalorder %s41, %s43
      %p50 = scmp.eq.s32.totalorder %s17, 1
      %p51 = por %p49, %p50
      %p52 = scmp.ne.s32.totalorder %s43, %s44
      %p53 = scmp.eq.s32.totalorder %s17, 0
      %p54 = por %p52, %p53
      %p55 = scmp.ne.s32.totalorder %s43, %s44
      %p56 = scmp.eq.s32.totalorder %s18, 1
      %p57 = por %p55, %p56
      %p59 = scmp.ne.s32.totalorder %s44, %s58
      %p60 = scmp.eq.s32.totalorder %s18, 0
      %p61 = por %p59, %p60
      %s62 = ssub.s32 %s12, %s19
      %p63 = scmp.eq.s32.totalorder %s62, 0
      %s65 = sadd.s32 %s64, 1
      %s66 = scalar_select %p63, %s64, %s65
      %p69 = pneg %p63
      %p70 = scmp.eq.s32.totalorder %s12, 1
      %p71 = por %p69, %p70
      %p72 = scmp.ne.s32.totalorder %s64, %s67
      %p73 = scmp.eq.s32.totalorder %s12, 0
      %p74 = por %p72, %p73
      %p75 = scmp.ne.s32.totalorder %s64, %s67
      %p76 = scmp.eq.s32.totalorder %s17, 1
      %p77 = por %p75, %p76
      %p78 = scmp.ne.s32.totalorder %s67, %s68
      %p79 = scmp.eq.s32.totalorder %s17, 0
      %p80 = por %p78, %p79
      %p81 = scmp.ne.s32.totalorder %s67, %s68
      %p82 = scmp.eq.s32.totalorder %s18, 1
      %p83 = por %p81, %p82
      %p85 = scmp.ne.s32.totalorder %s68, %s84
      %p86 = scmp.eq.s32.totalorder %s18, 0
      %p87 = por %p85, %p86
      %s88 = ssub.s32 %s12, %s19
      %p89 = scmp.eq.s32.totalorder %s88, 0
      %s91 = sadd.s32 %s90, 1
      %s92 = scalar_select %p89, %s90, %s91
      %p95 = pneg %p89
      %p96 = scmp.eq.s32.totalorder %s12, 1
      %p97 = por %p95, %p96
      %p98 = scmp.ne.s32.totalorder %s90, %s93
      %p99 = scmp.eq.s32.totalorder %s12, 0
      %p100 = por %p98, %p99
      %p101 = scmp.ne.s32.totalorder %s90, %s93
      %p102 = scmp.eq.s32.totalorder %s17, 1
      %p103 = por %p101, %p102
      %p104 = scmp.ne.s32.totalorder %s93, %s94
      %p105 = scmp.eq.s32.totalorder %s17, 0
      %p106 = por %p104, %p105
      %p107 = scmp.ne.s32.totalorder %s93, %s94
      %p108 = scmp.eq.s32.totalorder %s18, 1
      %p109 = por %p107, %p108
      %p111 = scmp.ne.s32.totalorder %s94, %s110
      %p112 = scmp.eq.s32.totalorder %s18, 0
      %p113 = por %p111, %p112
      %p114 = scmp.le.s32.totalorder 1, %s12
      %p115 = scmp.lt.s32.totalorder %s12, 3
      %p116 = pnand %p114, %p115
      %p117 = pneg %p116
      // Predicated region
      $region9: #{tpu_custom_call.1} parent=5 // pred_check
        _
      $region10: #{tpu_custom_call.1} parent=5 // pred_check_branch
        %119 = sbr.rel (%p116) target = $region12
      $region11: #{tpu_custom_call.1} parent=5 // pred_region
        %s120 = ssub.s32 %s12, 1
        // Predicated region
        $region13: #{tpu_custom_call.1} parent=11 // pred_check
          %p121 = pneg %p33
        $region14: #{tpu_custom_call.1} parent=11 // pred_check_branch
          %123 = sbr.rel (%p121) target = $region16
        $region15: #{tpu_custom_call.1} parent=11 // pred_region
          _
        $region16: #{tpu_custom_call.1} parent=11 // pred_fallthru
          _
        // Predicated region
        $region17: #{tpu_custom_call.1} parent=11 // pred_check
          %p124 = pneg %p54
        $region18: #{tpu_custom_call.1} parent=11 // pred_check_branch
          %126 = sbr.rel (%p124) target = $region20
        $region19: #{tpu_custom_call.1} parent=11 // pred_region
          _
        $region20: #{tpu_custom_call.1} parent=11 // pred_fallthru
          _
      $region12: #{tpu_custom_call.1} parent=5 // pred_fallthru
        _
      %p127 = scmp.lt.s32.totalorder %s12, 2
      // Predicated region
      $region21: #{tpu_custom_call.1} parent=5 // pred_check
        %p128 = pneg %p127
      $region22: #{tpu_custom_call.1} parent=5 // pred_check_branch
        %130 = sbr.rel (%p128) target = $region24
      $region23: #{tpu_custom_call.1} parent=5 // pred_region
        // Predicated region
        $region25: #{tpu_custom_call.1} parent=23 // pred_check
          %p131 = pneg %p74
        $region26: #{tpu_custom_call.1} parent=23 // pred_check_branch
          %133 = sbr.rel (%p131) target = $region28
        $region27: #{tpu_custom_call.1} parent=23 // pred_region
          %s134 = smul.u32 8, %s12
          %p135 = scmp.lt.s32.totalorder %s134, 15
          %s136 = scalar_select %p135, %s134, 15
          %s137 = smul.addr %s136, 2
          %s138 = smul.addr %s137, 8
          %s139 = scalar_lea.vmem %s2, %s138
          %s140 = smul.u32 8, %s12
        $region28: #{tpu_custom_call.1} parent=23 // pred_fallthru
          _
      $region24: #{tpu_custom_call.1} parent=5 // pred_fallthru
        _
      %p141 = scmp.le.s32.totalorder 1, %s12
      %p142 = scmp.lt.s32.totalorder %s12, 3
      %p143 = pnand %p141, %p142
      %p144 = pneg %p143
      // Predicated region
      $region29: #{tpu_custom_call.1} parent=5 // pred_check
        _
      $region30: #{tpu_custom_call.1} parent=5 // pred_check_branch
        %146 = sbr.rel (%p143) target = $region32
      $region31: #{tpu_custom_call.1} parent=5 // pred_region
        %s147 = ssub.s32 %s12, 1
        %p148 = pneg %p33
        %p149 = pneg %p30
        %p150 = pneg %p54
        %p151 = pneg %p51
        %s152 = smul.u32 8, %s17
        %p153 = scmp.lt.s32.totalorder %s152, 15
        %s154 = scalar_select %p153, %s152, 15
        %s155 = smul.addr %s154, 2
        %s156 = smul.addr %s155, 8
        %s157 = scalar_lea.vmem %s2, %s156
        %p158 = pneg %p80
        %p159 = pneg %p77
        %p160 = pneg %p106
        %p161 = pneg %p103
        %s162 = sand.u32 %s93, 1
        %s163 = scalar_lea.sflag [#allocation4], %s162
        %s164 = sand.u32 %s93, 1
        %s165 = smul.addr %s164, 64
        %s166 = scalar_lea.vmem [#allocation3], %s165
        %s167 = smul.u32 8, %s17
        %p168 = scmp.lt.s32.totalorder %s167, 15
        %s169 = scalar_select %p168, %s167, 15
        %s170 = smul.addr %s169, 2
        %s171 = smul.addr %s170, 8
        %s172 = scalar_lea.vmem %s2, %s171
        %s173 = smul.u32 8, %s17
        %s174 = smul.u32 2, %s17
        %175 = vst [vmem:[#allocation2] sm:$0xff] 0.0
        %176 = vst [vmem:[#allocation2 + $0x8] sm:$0xff] 0.0
        %177 = vst [vmem:[#allocation2 + $0x10] sm:$0xff] 0.0
        %178 = vst [vmem:[#allocation2 + $0x18] sm:$0xff] 0.0
        %179 = vst [vmem:[#allocation2 + $0x20] sm:$0xff] 0.0
        %180 = vst [vmem:[#allocation2 + $0x28] sm:$0xff] 0.0
        %181 = vst [vmem:[#allocation2 + $0x30] sm:$0xff] 0.0
        %182 = vst [vmem:[#allocation2 + $0x38] sm:$0xff] 0.0
        %183 = vst [vmem:[#allocation2 + $0x40] sm:$0xff] 0.0
        %184 = vst [vmem:[#allocation2 + $0x48] sm:$0xff] 0.0
        %185 = vst [vmem:[#allocation2 + $0x50] sm:$0xff] 0.0
        %186 = vst [vmem:[#allocation2 + $0x58] sm:$0xff] 0.0
        %187 = vst [vmem:[#allocation2 + $0x60] sm:$0xff] 0.0
        %188 = vst [vmem:[#allocation2 + $0x68] sm:$0xff] 0.0
        %189 = vst [vmem:[#allocation2 + $0x70] sm:$0xff] 0.0
        %190 = vst [vmem:[#allocation2 + $0x78] sm:$0xff] 0.0
        %v191 = vld [vmem:[%s172] sm:$0xff]
        %v192 = vld [vmem:[%s172 + $0x8] sm:$0xff]
        %vm193 = vcmask 130048
        %194 = vst.msk [vmem:[#allocation2] sm:$0xff] %vm193, %v191
        %195 = vst.msk [vmem:[#allocation2 + $0x10] sm:$0xff] %vm193, %v192
        %s196 = scalar_lea.vmem %s172, 16
        %v197 = vld [vmem:[%s196] sm:$0xff]
        %v198 = vld [vmem:[%s196 + $0x8] sm:$0xff]
        %199 = vst.msk [vmem:[#allocation2 + $0x8] sm:$0xff] %vm193, %v197
        %200 = vst.msk [vmem:[#allocation2 + $0x18] sm:$0xff] %vm193, %v198
        %s201 = scalar_lea.vmem %s172, 32
        %v202 = vld [vmem:[%s201] sm:$0xff]
        %v203 = vld [vmem:[%s201 + $0x8] sm:$0xff]
        %204 = vst.msk [vmem:[#allocation2 + $0x20] sm:$0xff] %vm193, %v202
        %205 = vst.msk [vmem:[#allocation2 + $0x30] sm:$0xff] %vm193, %v203
        %s206 = scalar_lea.vmem %s172, 48
        %v207 = vld [vmem:[%s206] sm:$0xff]
        %v208 = vld [vmem:[%s206 + $0x8] sm:$0xff]
        %209 = vst.msk [vmem:[#allocation2 + $0x28] sm:$0xff] %vm193, %v207
        %210 = vst.msk [vmem:[#allocation2 + $0x38] sm:$0xff] %vm193, %v208
        %s211 = scalar_lea.vmem %s172, 64
        %v212 = vld [vmem:[%s211] sm:$0xff]
        %v213 = vld [vmem:[%s211 + $0x8] sm:$0xff]
        %214 = vst.msk [vmem:[#allocation2 + $0x40] sm:$0xff] %vm193, %v212
        %215 = vst.msk [vmem:[#allocation2 + $0x50] sm:$0xff] %vm193, %v213
        %s216 = scalar_lea.vmem %s172, 80
        %v217 = vld [vmem:[%s216] sm:$0xff]
        %v218 = vld [vmem:[%s216 + $0x8] sm:$0xff]
        %219 = vst.msk [vmem:[#allocation2 + $0x48] sm:$0xff] %vm193, %v217
        %220 = vst.msk [vmem:[#allocation2 + $0x58] sm:$0xff] %vm193, %v218
        %s221 = scalar_lea.vmem %s172, 96
        %v222 = vld [vmem:[%s221] sm:$0xff]
        %v223 = vld [vmem:[%s221 + $0x8] sm:$0xff]
        %224 = vst.msk [vmem:[#allocation2 + $0x60] sm:$0xff] %vm193, %v222
        %225 = vst.msk [vmem:[#allocation2 + $0x70] sm:$0xff] %vm193, %v223
        %s226 = scalar_lea.vmem %s172, 112
        %v227 = vld [vmem:[%s226] sm:$0xff]
        %v228 = vld [vmem:[%s226 + $0x8] sm:$0xff]
        %229 = vst.msk [vmem:[#allocation2 + $0x68] sm:$0xff] %vm193, %v227
        %230 = vst.msk [vmem:[#allocation2 + $0x78] sm:$0xff] %vm193, %v228
        %v231 = vld [vmem:[#allocation2] sm:$0xff]
        %v232 = vld [vmem:[#allocation2 + $0x8] sm:$0xff]
        %v233 = vld [vmem:[#allocation2 + $0x10] sm:$0xff]
        %v234 = vld [vmem:[#allocation2 + $0x18] sm:$0xff]
        %v235 = vld [vmem:[#allocation2 + $0x20] sm:$0xff]
        %v236 = vld [vmem:[#allocation2 + $0x28] sm:$0xff]
        %v237 = vld [vmem:[#allocation2 + $0x30] sm:$0xff]
        %v238 = vld [vmem:[#allocation2 + $0x38] sm:$0xff]
        %v239 = vld [vmem:[#allocation2 + $0x40] sm:$0xff]
        %v240 = vld [vmem:[#allocation2 + $0x48] sm:$0xff]
        %v241 = vld [vmem:[#allocation2 + $0x50] sm:$0xff]
        %v242 = vld [vmem:[#allocation2 + $0x58] sm:$0xff]
        %v243 = vld [vmem:[#allocation2 + $0x60] sm:$0xff]
        %v244 = vld [vmem:[#allocation2 + $0x68] sm:$0xff]
        %v245 = vld [vmem:[#allocation2 + $0x70] sm:$0xff]
        %v246 = vld [vmem:[#allocation2 + $0x78] sm:$0xff]
        %v247 = vld [vmem:[%s1] sm:$0xff]
        %v248 = vld [vmem:[%s1 + $0x8] sm:$0xff]
        %v249 = vld [vmem:[%s1 + $0x10] sm:$0xff]
        %v250 = vld [vmem:[%s1 + $0x18] sm:$0xff]
        %v251 = vld [vmem:[%s1 + $0x20] sm:$0xff]
        %v252 = vld [vmem:[%s1 + $0x28] sm:$0xff]
        %v253 = vld [vmem:[%s1 + $0x30] sm:$0xff]
        %v254 = vld [vmem:[%s1 + $0x38] sm:$0xff]
        %v255 = vld [vmem:[%s1 + $0x40] sm:$0xff]
        %v256 = vld [vmem:[%s1 + $0x48] sm:$0xff]
        %v257 = vld [vmem:[%s1 + $0x50] sm:$0xff]
        %v258 = vld [vmem:[%s1 + $0x58] sm:$0xff]
        %v259 = vld [vmem:[%s1 + $0x60] sm:$0xff]
        %v260 = vld [vmem:[%s1 + $0x68] sm:$0xff]
        %v261 = vld [vmem:[%s1 + $0x70] sm:$0xff]
        %v262 = vld [vmem:[%s1 + $0x78] sm:$0xff]
        %v263 = vld [vmem:[%s1 + $0x80] sm:$0xff]
        %v264 = vld [vmem:[%s1 + $0x88] sm:$0xff]
        %v265 = vld [vmem:[%s1 + $0x90] sm:$0xff]
        %v266 = vld [vmem:[%s1 + $0x98] sm:$0xff]
        %v267 = vld [vmem:[%s1 + $0xa0] sm:$0xff]
        %v268 = vld [vmem:[%s1 + $0xa8] sm:$0xff]
        %v269 = vld [vmem:[%s1 + $0xb0] sm:$0xff]
        %v270 = vld [vmem:[%s1 + $0xb8] sm:$0xff]
        %v271 = vld [vmem:[%s1 + $0xc0] sm:$0xff]
        %v272 = vld [vmem:[%s1 + $0xc8] sm:$0xff]
        %v273 = vld [vmem:[%s1 + $0xd0] sm:$0xff]
        %v274 = vld [vmem:[%s1 + $0xd8] sm:$0xff]
        %v275 = vld [vmem:[%s1 + $0xe0] sm:$0xff]
        %v276 = vld [vmem:[%s1 + $0xe8] sm:$0xff]
        %v277 = vld [vmem:[%s1 + $0xf0] sm:$0xff]
        %v278 = vld [vmem:[%s1 + $0xf8] sm:$0xff]
        %279 = vmatprep.subr.mxu0 0.0
        %280 = vmatpush1.msra.mxu0 %v247
        %281 = vmatprep.subr.mxu0 0.0
        %282 = vmatpush1.msra.mxu0 %v248
        %283 = vmatprep.subr.mxu0 0.0
        %284 = vmatpush1.msra.mxu0 %v249
        %285 = vmatprep.subr.mxu0 0.0
        %286 = vmatpush1.msra.mxu0 %v250
        %287 = vmatprep.subr.mxu0 0.0
        %288 = vmatpush1.msra.mxu0 %v251
        %289 = vmatprep.subr.mxu0 0.0
        %290 = vmatpush1.msra.mxu0 %v252
        %291 = vmatprep.subr.mxu0 0.0
        %292 = vmatpush1.msra.mxu0 %v253
        %293 = vmatprep.subr.mxu0 0.0
        %294 = vmatpush1.msra.mxu0 %v254
        %295 = vmatprep.subr.mxu0 0.0
        %296 = vmatpush1.msra.mxu0 %v255
        %297 = vmatprep.subr.mxu0 0.0
        %298 = vmatpush1.msra.mxu0 %v256
        %299 = vmatprep.subr.mxu0 0.0
        %300 = vmatpush1.msra.mxu0 %v257
        %301 = vmatprep.subr.mxu0 0.0
        %302 = vmatpush1.msra.mxu0 %v258
        %303 = vmatprep.subr.mxu0 0.0
        %304 = vmatpush1.msra.mxu0 %v259
        %305 = vmatprep.subr.mxu0 0.0
        %306 = vmatpush1.msra.mxu0 %v260
        %307 = vmatprep.subr.mxu0 0.0
        %308 = vmatpush1.msra.mxu0 %v261
        %309 = vmatprep.subr.mxu0 0.0
        %310 = vmatpush1.msra.mxu0 %v262
        %311 = vmatprep.subr.mxu0 0.0
        %312 = vmatpush1.msra.mxu0 %v263
        %313 = vmatprep.subr.mxu0 0.0
        %314 = vmatpush1.msra.mxu0 %v264
        %315 = vmatprep.subr.mxu0 0.0
        %316 = vmatpush1.msra.mxu0 %v265
        %317 = vmatprep.subr.mxu0 0.0
        %318 = vmatpush1.msra.mxu0 %v266
        %319 = vmatprep.subr.mxu0 0.0
        %320 = vmatpush1.msra.mxu0 %v267
        %321 = vmatprep.subr.mxu0 0.0
        %322 = vmatpush1.msra.mxu0 %v268
        %323 = vmatprep.subr.mxu0 0.0
        %324 = vmatpush1.msra.mxu0 %v269
        %325 = vmatprep.subr.mxu0 0.0
        %326 = vmatpush1.msra.mxu0 %v270
        %327 = vmatprep.subr.mxu0 0.0
        %328 = vmatpush1.msra.mxu0 %v271
        %329 = vmatprep.subr.mxu0 0.0
        %330 = vmatpush1.msra.mxu0 %v272
        %331 = vmatprep.subr.mxu0 0.0
        %332 = vmatpush1.msra.mxu0 %v273
        %333 = vmatprep.subr.mxu0 0.0
        %334 = vmatpush1.msra.mxu0 %v274
        %335 = vmatprep.subr.mxu0 0.0
        %336 = vmatpush1.msra.mxu0 %v275
        %337 = vmatprep.subr.mxu0 0.0
        %338 = vmatpush1.msra.mxu0 %v276
        %339 = vmatprep.subr.mxu0 0.0
        %340 = vmatpush1.msra.mxu0 %v277
        %341 = vmatprep.subr.mxu0 0.0
        %342 = vmatpush1.msra.mxu0 %v278
        %343 = vmatprep.mubr.f32.mxu0 %v232
        %344 = vmatmul.mubr.f32.gmra.mrb[0].mxu0 %v231
        %v345 = vpop.f32.mrb[0].mxu0
        %v346 = vadd.f32 0.0, %v345
        %v347 = vpop.f32.mrb[0].mxu0
        %348 = vmatprep.mubr.f32.mxu0 %v234
        %349 = vmatmul.mubr.f32.gmra.mrb[0].mxu0 %v233
        %v350 = vpop.f32.mrb[0].mxu0
        %v351 = vadd.f32 0.0, %v350
        %v352 = vpop.f32.mrb[0].mxu0
        %353 = vmatprep.mubr.f32.mxu0 %v236
        %354 = vmatmul.mubr.f32.gmra.mrb[0].mxu0 %v235
        %v355 = vpop.f32.mrb[0].mxu0
        %v356 = vadd.f32 0.0, %v355
        %v357 = vpop.f32.mrb[0].mxu0
        %358 = vmatprep.mubr.f32.mxu0 %v238
        %359 = vmatmul.mubr.f32.gmra.mrb[0].mxu0 %v237
        %v360 = vpop.f32.mrb[0].mxu0
        %v361 = vadd.f32 0.0, %v360
        %v362 = vpop.f32.mrb[0].mxu0
        %363 = vmatprep.mubr.f32.mxu0 %v240
        %364 = vmatmul.mubr.f32.gmra.mrb[0].mxu0 %v239
        %v365 = vpop.f32.mrb[0].mxu0
        %v366 = vadd.f32 0.0, %v365
        %v367 = vpop.f32.mrb[0].mxu0
        %368 = vmatprep.mubr.f32.mxu0 %v242
        %369 = vmatmul.mubr.f32.gmra.mrb[0].mxu0 %v241
        %v370 = vpop.f32.mrb[0].mxu0
        %v371 = vadd.f32 0.0, %v370
        %v372 = vpop.f32.mrb[0].mxu0
        %373 = vmatprep.mubr.f32.mxu0 %v244
        %374 = vmatmul.mubr.f32.gmra.mrb[0].mxu0 %v243
        %v375 = vpop.f32.mrb[0].mxu0
        %v376 = vadd.f32 0.0, %v375
        %v377 = vpop.f32.mrb[0].mxu0
        %378 = vmatprep.mubr.f32.mxu0 %v246
        %379 = vmatmul.mubr.f32.gmra.mrb[0].mxu0 %v245
        %v380 = vpop.f32.mrb[0].mxu0
        %v381 = vadd.f32 0.0, %v380
        %v382 = vpop.f32.mrb[0].mxu0
        %383 = vdwg.mxu0
        %v384 = vld [vmem:[%s0] sm:$0xff]
        %v385 = vld [vmem:[%s0 + $0x8] sm:$0xff]
        %v386 = vld [vmem:[%s0 + $0x10] sm:$0xff]
        %v387 = vld [vmem:[%s0 + $0x18] sm:$0xff]
        %v388 = vld [vmem:[%s0 + $0x20] sm:$0xff]
        %v389 = vld [vmem:[%s0 + $0x28] sm:$0xff]
        %v390 = vld [vmem:[%s0 + $0x30] sm:$0xff]
        %v391 = vld [vmem:[%s0 + $0x38] sm:$0xff]
        %vm392 = vcmask 523264
        %v394 = vsel %vm392, %v384, 0
        %v397 = vsel %vm392, %v385, 0
        %v400 = vsel %vm392, %v386, 0
        %v403 = vsel %vm392, %v387, 0
        %v406 = vsel %vm392, %v388, 0
        %v409 = vsel %vm392, %v389, 0
        %v412 = vsel %vm392, %v390, 0
        %v415 = vsel %vm392, %v391, 0
        %417 = vmatprep.subr.mxu0 0.0
        %418 = vmatpush1.msra.mxu0 %v346
        %419 = vmatprep.subr.mxu0 0.0
        %420 = vmatpush1.msra.mxu0 %v351
        %421 = vmatprep.subr.mxu0 0.0
        %422 = vmatpush1.msra.mxu0 %v356
        %423 = vmatprep.subr.mxu0 0.0
        %424 = vmatpush1.msra.mxu0 %v361
        %425 = vmatprep.subr.mxu0 0.0
        %426 = vmatpush1.msra.mxu0 %v366
        %427 = vmatprep.subr.mxu0 0.0
        %428 = vmatpush1.msra.mxu0 %v371
        %429 = vmatprep.subr.mxu0 0.0
        %430 = vmatpush1.msra.mxu0 %v376
        %431 = vmatprep.subr.mxu0 0.0
        %432 = vmatpush1.msra.mxu0 %v381
        %433 = vmatprep.subr.mxu0 0.0
        %434 = vmatpush1.msra.mxu0 0.0
        %435 = vmatprep.subr.mxu0 0.0
        %436 = vmatpush1.msra.mxu0 0.0
        %437 = vmatprep.subr.mxu0 0.0
        %438 = vmatpush1.msra.mxu0 0.0
        %439 = vmatprep.subr.mxu0 0.0
        %440 = vmatpush1.msra.mxu0 0.0
        %441 = vmatprep.subr.mxu0 0.0
        %442 = vmatpush1.msra.mxu0 0.0
        %443 = vmatprep.subr.mxu0 0.0
        %444 = vmatpush1.msra.mxu0 0.0
        %445 = vmatprep.subr.mxu0 0.0
        %446 = vmatpush1.msra.mxu0 0.0
        %447 = vmatprep.subr.mxu0 0.0
        %448 = vmatpush1.msra.mxu0 0.0
        %449 = vmatprep.subr.mxu0 0.0
        %450 = vmatpush1.msra.mxu0 0.0
        %451 = vmatprep.subr.mxu0 0.0
        %452 = vmatpush1.msra.mxu0 0.0
        %453 = vmatprep.subr.mxu0 0.0
        %454 = vmatpush1.msra.mxu0 0.0
        %455 = vmatprep.subr.mxu0 0.0
        %456 = vmatpush1.msra.mxu0 0.0
        %457 = vmatprep.subr.mxu0 0.0
        %458 = vmatpush1.msra.mxu0 0.0
        %459 = vmatprep.subr.mxu0 0.0
        %460 = vmatpush1.msra.mxu0 0.0
        %461 = vmatprep.subr.mxu0 0.0
        %462 = vmatpush1.msra.mxu0 0.0
        %463 = vmatprep.subr.mxu0 0.0
        %464 = vmatpush1.msra.mxu0 0.0
        %465 = vmatprep.subr.mxu0 0.0
        %466 = vmatpush1.msra.mxu0 0.0
        %467 = vmatprep.subr.mxu0 0.0
        %468 = vmatpush1.msra.mxu0 0.0
        %469 = vmatprep.subr.mxu0 0.0
        %470 = vmatpush1.msra.mxu0 0.0
        %471 = vmatprep.subr.mxu0 0.0
        %472 = vmatpush1.msra.mxu0 0.0
        %473 = vmatprep.subr.mxu0 0.0
        %474 = vmatpush1.msra.mxu0 0.0
        %475 = vmatprep.subr.mxu0 0.0
        %476 = vmatpush1.msra.mxu0 0.0
        %477 = vmatprep.subr.mxu0 0.0
        %478 = vmatpush1.msra.mxu0 0.0
        %479 = vmatprep.subr.mxu0 0.0
        %480 = vmatpush1.msra.mxu0 0.0
        %481 = vmatprep.mubr.f32.mxu0 0.0
        %482 = vmatmul.mubr.f32.gmra.mrb[0].mxu0 %v394
        %v483 = vpop.f32.mrb[0].mxu0
        %v484 = vadd.f32 0.0, %v483
        %v485 = vpop.f32.mrb[0].mxu0
        %486 = vmatprep.mubr.f32.mxu0 0.0
        %487 = vmatmul.mubr.f32.gmra.mrb[0].mxu0 %v397
        %v488 = vpop.f32.mrb[0].mxu0
        %v489 = vadd.f32 0.0, %v488
        %v490 = vpop.f32.mrb[0].mxu0
        %491 = vmatprep.mubr.f32.mxu0 0.0
        %492 = vmatmul.mubr.f32.gmra.mrb[0].mxu0 %v400
        %v493 = vpop.f32.mrb[0].mxu0
        %v494 = vadd.f32 0.0, %v493
        %v495 = vpop.f32.mrb[0].mxu0
        %496 = vmatprep.mubr.f32.mxu0 0.0
        %497 = vmatmul.mubr.f32.gmra.mrb[0].mxu0 %v403
        %v498 = vpop.f32.mrb[0].mxu0
        %v499 = vadd.f32 0.0, %v498
        %v500 = vpop.f32.mrb[0].mxu0
        %501 = vmatprep.mubr.f32.mxu0 0.0
        %502 = vmatmul.mubr.f32.gmra.mrb[0].mxu0 %v406
        %v503 = vpop.f32.mrb[0].mxu0
        %v504 = vadd.f32 0.0, %v503
        %v505 = vpop.f32.mrb[0].mxu0
        %506 = vmatprep.mubr.f32.mxu0 0.0
        %507 = vmatmul.mubr.f32.gmra.mrb[0].mxu0 %v409
        %v508 = vpop.f32.mrb[0].mxu0
        %v509 = vadd.f32 0.0, %v508
        %v510 = vpop.f32.mrb[0].mxu0
        %511 = vmatprep.mubr.f32.mxu0 0.0
        %512 = vmatmul.mubr.f32.gmra.mrb[0].mxu0 %v412
        %v513 = vpop.f32.mrb[0].mxu0
        %v514 = vadd.f32 0.0, %v513
        %v515 = vpop.f32.mrb[0].mxu0
        %516 = vmatprep.mubr.f32.mxu0 0.0
        %517 = vmatmul.mubr.f32.gmra.mrb[0].mxu0 %v415
        %v518 = vpop.f32.mrb[0].mxu0
        %v519 = vadd.f32 0.0, %v518
        %v520 = vpop.f32.mrb[0].mxu0
        %521 = vdwg.mxu0
        %vm522 = vcmask 261120
        %523 = vst.msk [vmem:[%s166] sm:$0xff] %vm522, %v484
        %524 = vst.msk [vmem:[%s166 + $0x8] sm:$0xff] %vm522, %v489
        %525 = vst.msk [vmem:[%s166 + $0x10] sm:$0xff] %vm522, %v494
        %526 = vst.msk [vmem:[%s166 + $0x18] sm:$0xff] %vm522, %v499
        %s527 = scalar_lea.vmem %s166, 32 [#allocation3]
        %528 = vst.msk [vmem:[%s527] sm:$0xff] %vm522, %v504
        %529 = vst.msk [vmem:[%s527 + $0x8] sm:$0xff] %vm522, %v509
        %530 = vst.msk [vmem:[%s527 + $0x10] sm:$0xff] %vm522, %v514
        %531 = vst.msk [vmem:[%s527 + $0x18] sm:$0xff] %vm522, %v519
        %s532 = sand.u32 %s93, 1
        %s533 = scalar_lea.sflag [#allocation4], %s532
        %s534 = sand.u32 %s93, 1
        %s535 = smul.addr %s534, 64
        %s536 = scalar_lea.vmem [#allocation3], %s535
        // Predicated region
        $region33: #{tpu_custom_call.1} parent=31 // pred_check
          %p537 = pneg %p103
        $region34: #{tpu_custom_call.1} parent=31 // pred_check_branch
          %539 = sbr.rel (%p537) target = $region36
        $region35: #{tpu_custom_call.1} parent=31 // pred_region
          %s540 = smul.u32 2, %s17
          %s542 = ssub.s32 1024, 1024
          %543 = vsyncadd %s533, %s542
          %s544 = smul.addr %s540, 4
          %s545 = smul.addr %s544, 128
          %s546 = scalar_lea.hbm %s3, %s545
          %s547 = sshll.u32 %s536, 4
          %s548 = int_to_ptr.vmem [resolvable:$true] %s547
          %553 = dma.vmem_to_hbm [thread:$0]  %s548, 1024, %s546, %s533, 128, 128, 8
        $region36: #{tpu_custom_call.1} parent=31 // pred_fallthru
          _
      $region32: #{tpu_custom_call.1} parent=5 // pred_fallthru
        _
      %p554 = scmp.le.s32.totalorder 2, %s12
      // Predicated region
      $region37: #{tpu_custom_call.1} parent=5 // pred_check
        %p555 = pneg %p554
      $region38: #{tpu_custom_call.1} parent=5 // pred_check_branch
        %557 = sbr.rel (%p555) target = $region40
      $region39: #{tpu_custom_call.1} parent=5 // pred_region
        %s558 = ssub.s32 %s12, 2
        // Predicated region
        $region41: #{tpu_custom_call.1} parent=39 // pred_check
          %p559 = pneg %p109
        $region42: #{tpu_custom_call.1} parent=39 // pred_check_branch
          %561 = sbr.rel (%p559) target = $region44
        $region43: #{tpu_custom_call.1} parent=39 // pred_region
          %s562 = sand.u32 %s94, 1
          %s563 = scalar_lea.sflag [#allocation4], %s562
          %s564 = sand.u32 %s94, 1
          %s565 = smul.addr %s564, 64
          %s566 = scalar_lea.vmem [#allocation3], %s565
          %567 = dma.done %s563, 1024
        $region44: #{tpu_custom_call.1} parent=39 // pred_fallthru
          _
      $region40: #{tpu_custom_call.1} parent=5 // pred_fallthru
        _
    $region6: #{tpu_custom_call.1} parent=1 // loop_footer
      %s16 = sadd.s32 1, %s12
    $region7: #{tpu_custom_call.1} parent=1 // loop_footer_branch
      %11 = sbr.rel target = $region3
    $region8: #{tpu_custom_call.1} parent=1 // loop_exit
      _
    %568 = vsyncpa [#allocation4], 1
    %s569 = scalar_lea.sflag [#allocation4], 1
    %570 = vsyncpa %s569, 1

</llo_original>
